<compile_context>
chip_gen: v6e
topology: v6e:2x2x1
jax: 0.10.0
libtpu: 0.0.40
codegen_flags: <defaults>
</compile_context>

<pallas_src>
import jax
import jax.numpy as jnp
from jax.experimental import pallas as pl
from jax.experimental.pallas import tpu as pltpu

LANE = 128


def _tversky_sums_kernel(x_ref, t_ref, o_ref):
    k = pl.program_id(1)

    # Zero this split's accumulator block on its first reduction step.
    @pl.when(k == 0)
    def _():
        o_ref[...] = jnp.zeros_like(o_ref)

    s = jax.nn.sigmoid(x_ref[...].astype(jnp.float32))  # EUP
    t = t_ref[...].astype(jnp.float32)

    tr = x_ref.shape[0]
    g = tr // 8

    st = s * t
    # Layout-preserving reshape into (8,128) f32 tiles; axis-0 sum is pure
    # VPU adds (no cross-lane XLU traffic per step).
    o_ref[0:8, :] += jnp.sum(st.reshape(g, 8, LANE), axis=0)   # sum(s*t)
    o_ref[8:16, :] += jnp.sum(s.reshape(g, 8, LANE), axis=0)   # sum(s)
    o_ref[16:24, :] += jnp.sum(t.reshape(g, 8, LANE), axis=0)  # sum(t)


def tversky_loss(inputs, targets, smooth=1.0, alpha=0.5, beta=0.5, *,
                 tile_rows=1024, num_splits=2):
    """Matches TverskyLoss.forward(inputs, targets, smooth, alpha, beta)."""
    assert tile_rows % 8 == 0 and tile_rows >= 8

    x = inputs.reshape(-1)
    t = targets.reshape(-1)
    n = x.shape[0]

    rows = pl.cdiv(n, LANE)
    rows8 = ((rows + 7) // 8) * 8                  # at least one (8,128) tile
    tr = min(tile_rows, rows8)                     # clamp tile for small inputs
    tiles = pl.cdiv(rows8, tr)
    splits = max(1, min(num_splits, tiles))        # v7x: shard across both TCs
    tiles = pl.cdiv(tiles, splits) * splits
    steps = tiles // splits
    rows_padded = tiles * tr
    pad = rows_padded * LANE - n

    # Pad logits with a huge negative value (sigmoid -> exactly 0) and targets
    # with 0, so padded elements contribute nothing to any of the three sums.
    # Native dtypes are preserved (no wrapper-side astype copies).
    xp = jnp.pad(x, (0, pad), constant_values=-1e9).reshape(rows_padded, LANE)
    tp = jnp.pad(t, (0, pad)).reshape(rows_padded, LANE)

    bytes_accessed = (xp.size * xp.dtype.itemsize
                      + tp.size * tp.dtype.itemsize
                      + splits * 24 * LANE * 4)
    cost = pl.CostEstimate(flops=5 * max(n, 1),
                           transcendentals=max(n, 1),
                           bytes_accessed=bytes_accessed)

    out = pl.pallas_call(
        _tversky_sums_kernel,
        out_shape=jax.ShapeDtypeStruct((splits * 24, LANE), jnp.float32),
        grid_spec=pltpu.PrefetchScalarGridSpec(
            num_scalar_prefetch=0,
            grid=(splits, steps),
            in_specs=[
                pl.BlockSpec((tr, LANE), lambda s, k: (s * steps + k, 0)),
                pl.BlockSpec((tr, LANE), lambda s, k: (s * steps + k, 0)),
            ],
            out_specs=pl.BlockSpec((24, LANE), lambda s, k: (s, 0)),
        ),
        compiler_params=pltpu.CompilerParams(
            dimension_semantics=("parallel", "arbitrary")),
        cost_estimate=cost,
    )(xp, tp)

    # Tiny finalize in plain JAX: combine per-split (8,128) partials.
    parts = out.reshape(splits, 3, 8, LANE)
    sums = jnp.sum(parts, axis=(0, 2, 3))          # -> (3,)
    tp_sum, s_sum, t_sum = sums[0], sums[1], sums[2]
    fp = s_sum - tp_sum
    fn = t_sum - tp_sum
    tversky = (tp_sum + smooth) / (tp_sum + alpha * fp + beta * fn + smooth)
    return 1.0 - tversky


def _reference_loss(inputs, targets, smooth=1.0, alpha=0.5, beta=0.5):
    s = jax.nn.sigmoid(inputs.astype(jnp.float32)).reshape(-1)
    t = targets.astype(jnp.float32).reshape(-1)
    tp = jnp.sum(s * t)
    fp = jnp.sum((1.0 - t) * s)
    fn = jnp.sum(t * (1.0 - s))
    tversky = (tp + smooth) / (tp + alpha * fp + beta * fn + smooth)
    return 1.0 - tversky


if __name__ == "__main__":
    key = jax.random.PRNGKey(0)
    k1, k2 = jax.random.split(key)

    # NCHW logits and binary targets, same convention as the PyTorch module.
    x = jax.random.normal(k1, (2, 4, 16, 16), dtype=jnp.float32)
    tgt = (jax.random.uniform(k2, (2, 4, 16, 16)) > 0.5).astype(jnp.float32)

    loss = tversky_loss(x, tgt)
    loss = jax.block_until_ready(loss)

    ref = _reference_loss(x, tgt)
    assert jnp.allclose(loss, ref, atol=1e-5, rtol=1e-5), (loss, ref)

    print("KERNEL_OK")
</pallas_src>

<mosaic_0001>
module attributes {stable_mosaic.version = 11 : i64} {
  func.func @_tversky_sums_kernel(%arg0: i32, %arg1: i32, %arg2: memref<16x128xf32, #tpu.memory_space<vmem>>, %arg3: memref<16x128xf32, #tpu.memory_space<vmem>>, %arg4: memref<24x128xf32, #tpu.memory_space<vmem>>) attributes {dimension_semantics = [#tpu.dimension_semantics<parallel>, #tpu.dimension_semantics<arbitrary>], iteration_bounds = array<i64: 1, 1>, scalar_prefetch = 0 : i64, scratch_operands = 0 : i64, tpu.core_type = #tpu.core_type<tc>, window_params = [{transform_indices = @transform_0, window_bounds = array<i64: 16, 128>}, {transform_indices = @transform_1, window_bounds = array<i64: 16, 128>}, {transform_indices = @transform_2, window_bounds = array<i64: 24, 128>}]} {
    %c0_i32 = arith.constant 0 : i32
    %0 = arith.cmpi eq, %arg1, %c0_i32 : i32
    %1 = arith.extui %0 : i1 to i32
    %c0_i32_0 = arith.constant 0 : i32
    %2 = arith.cmpi ne, %1, %c0_i32_0 : i32
    scf.if %2 {
      %cst_17 = arith.constant 0.000000e+00 : f32
      %26 = vector.broadcast %cst_17 : f32 to vector<24x128xf32>
      %c0_18 = arith.constant 0 : index
      %c0_19 = arith.constant 0 : index
      %27 = vector.load %arg4[%c0_18, %c0_19] : memref<24x128xf32, #tpu.memory_space<vmem>>, vector<24x128xf32>
      tpu.vector_store %arg4[%c0_18, %c0_19], %26 {strides = array<i32>} : memref<24x128xf32, #tpu.memory_space<vmem>>, vector<24x128xf32>,
    } else {
    }
    %c0 = arith.constant 0 : index
    %c0_1 = arith.constant 0 : index
    %3 = vector.load %arg2[%c0, %c0_1] : memref<16x128xf32, #tpu.memory_space<vmem>>, vector<16x128xf32>
    %4 = arith.negf %3 : vector<16x128xf32>
    %5 = math.exp %4 : vector<16x128xf32>
    %cst = arith.constant 1.000000e+00 : f32
    %6 = vector.broadcast %cst : f32 to vector<16x128xf32>
    %7 = arith.addf %6, %5 : vector<16x128xf32>
    %8 = arith.divf %6, %7 : vector<16x128xf32>
    %c0_2 = arith.constant 0 : index
    %c0_3 = arith.constant 0 : index
    %9 = vector.load %arg3[%c0_2, %c0_3] : memref<16x128xf32, #tpu.memory_space<vmem>>, vector<16x128xf32>
    %10 = arith.mulf %8, %9 : vector<16x128xf32>
    %c0_4 = arith.constant 0 : index
    %c0_5 = arith.constant 0 : index
    %11 = vector.load %arg4[%c0_4, %c0_5] : memref<24x128xf32, #tpu.memory_space<vmem>>, vector<8x128xf32>
    %12 = vector.shape_cast %10 : vector<16x128xf32> to vector<2x8x128xf32>
    %cst_6 = arith.constant dense<0.000000e+00> : vector<8x128xf32>
    %13 = vector.multi_reduction <add>, %12, %cst_6 [0] : vector<2x8x128xf32> to vector<8x128xf32>
    %14 = arith.addf %11, %13 : vector<8x128xf32>
    %c0_7 = arith.constant 0 : index
    %c0_8 = arith.constant 0 : index
    %15 = vector.load %arg4[%c0_7, %c0_8] : memref<24x128xf32, #tpu.memory_space<vmem>>, vector<8x128xf32>
    tpu.vector_store %arg4[%c0_7, %c0_8], %14 {strides = array<i32>} : memref<24x128xf32, #tpu.memory_space<vmem>>, vector<8x128xf32>,
    %c8 = arith.constant 8 : index
    %c0_9 = arith.constant 0 : index
    %16 = vector.load %arg4[%c8, %c0_9] : memref<24x128xf32, #tpu.memory_space<vmem>>, vector<8x128xf32>
    %17 = vector.shape_cast %8 : vector<16x128xf32> to vector<2x8x128xf32>
    %cst_10 = arith.constant dense<0.000000e+00> : vector<8x128xf32>
    %18 = vector.multi_reduction <add>, %17, %cst_10 [0] : vector<2x8x128xf32> to vector<8x128xf32>
    %19 = arith.addf %16, %18 : vector<8x128xf32>
    %c8_11 = arith.constant 8 : index
    %c0_12 = arith.constant 0 : index
    %20 = vector.load %arg4[%c8_11, %c0_12] : memref<24x128xf32, #tpu.memory_space<vmem>>, vector<8x128xf32>
    tpu.vector_store %arg4[%c8_11, %c0_12], %19 {strides = array<i32>} : memref<24x128xf32, #tpu.memory_space<vmem>>, vector<8x128xf32>,
    %c16 = arith.constant 16 : index
    %c0_13 = arith.constant 0 : index
    %21 = vector.load %arg4[%c16, %c0_13] : memref<24x128xf32, #tpu.memory_space<vmem>>, vector<8x128xf32>
    %22 = vector.shape_cast %9 : vector<16x128xf32> to vector<2x8x128xf32>
    %cst_14 = arith.constant dense<0.000000e+00> : vector<8x128xf32>
    %23 = vector.multi_reduction <add>, %22, %cst_14 [0] : vector<2x8x128xf32> to vector<8x128xf32>
    %24 = arith.addf %21, %23 : vector<8x128xf32>
    %c16_15 = arith.constant 16 : index
    %c0_16 = arith.constant 0 : index
    %25 = vector.load %arg4[%c16_15, %c0_16] : memref<24x128xf32, #tpu.memory_space<vmem>>, vector<8x128xf32>
    tpu.vector_store %arg4[%c16_15, %c0_16], %24 {strides = array<i32>} : memref<24x128xf32, #tpu.memory_space<vmem>>, vector<8x128xf32>,
    return
  }
  func.func @transform_0(%arg0: i32, %arg1: i32) -> (i32, i32) {
    %c1_i32 = arith.constant 1 : i32
    %0 = arith.muli %arg0, %c1_i32 : i32
    %1 = arith.addi %0, %arg1 : i32
    %c0_i32 = arith.constant 0 : i32
    %c0_i32_0 = arith.constant 0 : i32
    return %1, %c0_i32 : i32, i32
  }
  func.func @transform_1(%arg0: i32, %arg1: i32) -> (i32, i32) {
    %c1_i32 = arith.constant 1 : i32
    %0 = arith.muli %arg0, %c1_i32 : i32
    %1 = arith.addi %0, %arg1 : i32
    %c0_i32 = arith.constant 0 : i32
    %c0_i32_0 = arith.constant 0 : i32
    return %1, %c0_i32 : i32, i32
  }
  func.func @transform_2(%arg0: i32, %arg1: i32) -> (i32, i32) {
    %c0_i32 = arith.constant 0 : i32
    %c0_i32_0 = arith.constant 0 : i32
    return %arg0, %c0_i32 : i32, i32
  }
}

</mosaic_0001>

<llo_original>
// kernel: tpu_custom_call.1
$region0: #{tpu_custom_call.1}
  #allocation0 [shape = 'u32[]', space=smem, size = 0x4, offset = 0x4, fixed_abs, tag = 'smem constant byte address 0x4 - core index']
  #allocation1 [shape = 'u32[144,128]{1,0:T(1,128)}', space=vmem, size = 0x12000, scoped, tag = 'internal scratch']
  %s0 = inlined_call_operand.hbm [shape: f32[16,128], index: 0, kind: input, shape index: {}]
  %s1 = inlined_call_operand.hbm [shape: f32[16,128], index: 1, kind: input, shape index: {}]
  %s2 = inlined_call_operand.hbm [shape: f32[24,128], index: 2, kind: output, shape index: {}]
  %s3 = sld [smem:[#allocation0]]
  $region30: #{tpu_custom_call.1} parent=0
    _
  %s5 = ssub.s32 1, %s3
  %s6 = scalar_select 0, %s5, %s3
  $region1: #{tpu_custom_call.1} parent=0
    #allocation2 [shape = 'u8[8192]{0}', space=vmem, size = 0x2000, scoped, tag = 'input window, operand 0, single buffered']
    #allocation3 [shape = 's32[1]{0}', space=sflag, size = 0x4, scoped, tag = 'scoped memory for tpu_custom_call.1']
    #allocation4 [shape = 's32[1]{0}', space=sflag, size = 0x4, scoped, tag = 'scoped memory for tpu_custom_call.1']
    #allocation5 [shape = 'u8[8192]{0}', space=vmem, size = 0x2000, scoped, tag = 'input window, operand 1, single buffered']
    #allocation6 [shape = 's32[1]{0}', space=sflag, size = 0x4, scoped, tag = 'scoped memory for tpu_custom_call.1']
    #allocation7 [shape = 'u8[12288]{0}', space=vmem, size = 0x3000, scoped, tag = 'output window, operand 0, single buffered']
    %7 = vsyncpa [#allocation3], 0
    %8 = vsyncpa [#allocation6], 0
    %9 = vsyncpa [#allocation4], 0
    // Predicated region
    $region2: #{tpu_custom_call.1} parent=1 // pred_check
      _
    $region3: #{tpu_custom_call.1} parent=1 // pred_check_branch
      %11 = sbr.rel (0) target = $region5
    $region4: #{tpu_custom_call.1} parent=1 // pred_region
      %s12 = sadd.s32 0, 0
      %s13 = smul.u32 2, %s12
      %s15 = ssub.s32 256, 256
      %16 = vsyncadd [#allocation3], %s15
      %s17 = smul.addr %s13, 128
      %s18 = scalar_lea.hbm %s0, %s17
      %s19 = sshll.u32 [#allocation2], 4
      %s20 = int_to_ptr.vmem [resolvable:$true] %s19
      %25 = dma.hbm_to_vmem [thread:$0]  %s18, 256, %s20, [#allocation3], 128, 128, 8
    $region5: #{tpu_custom_call.1} parent=1 // pred_fallthru
      _
    // Predicated region
    $region6: #{tpu_custom_call.1} parent=1 // pred_check
      _
    $region7: #{tpu_custom_call.1} parent=1 // pred_check_branch
      %27 = sbr.rel (0) target = $region9
    $region8: #{tpu_custom_call.1} parent=1 // pred_region
      %s28 = sadd.s32 0, 0
      %s29 = smul.u32 2, %s28
      %s31 = ssub.s32 256, 256
      %32 = vsyncadd [#allocation6], %s31
      %s33 = smul.addr %s29, 128
      %s34 = scalar_lea.hbm %s1, %s33
      %s35 = sshll.u32 [#allocation5], 4
      %s36 = int_to_ptr.vmem [resolvable:$true] %s35
      %41 = dma.hbm_to_vmem [thread:$0]  %s34, 256, %s36, [#allocation6], 128, 128, 8
    $region9: #{tpu_custom_call.1} parent=1 // pred_fallthru
      _
    // Predicated region
    $region10: #{tpu_custom_call.1} parent=1 // pred_check
      _
    $region11: #{tpu_custom_call.1} parent=1 // pred_check_branch
      %43 = sbr.rel (0) target = $region13
    $region12: #{tpu_custom_call.1} parent=1 // pred_region
      %44 = dma.done [#allocation3], 256
    $region13: #{tpu_custom_call.1} parent=1 // pred_fallthru
      _
    // Predicated region
    $region14: #{tpu_custom_call.1} parent=1 // pred_check
      _
    $region15: #{tpu_custom_call.1} parent=1 // pred_check_branch
      %46 = sbr.rel (0) target = $region17
    $region16: #{tpu_custom_call.1} parent=1 // pred_region
      %47 = dma.done [#allocation6], 256
    $region17: #{tpu_custom_call.1} parent=1 // pred_fallthru
      _
    %s48 = sadd.s32 0, 0
    %s49 = smul.u32 2, %s48
    %s50 = sadd.s32 0, 0
    %s51 = smul.u32 2, %s50
    %p52 = scmp.eq.s32.totalorder 0, 0
    // Predicated region
    $region18: #{tpu_custom_call.1} parent=1 // pred_check
      %p53 = pneg %p52
    $region19: #{tpu_custom_call.1} parent=1 // pred_check_branch
      %55 = sbr.rel (%p53) target = $region21
    $region20: #{tpu_custom_call.1} parent=1 // pred_region
      %56 = vst [vmem:[#allocation7] sm:$0xff] 0.0
      %57 = vst [vmem:[#allocation7 + $0x8] sm:$0xff] 0.0
      %58 = vst [vmem:[#allocation7 + $0x10] sm:$0xff] 0.0
    $region21: #{tpu_custom_call.1} parent=1 // pred_fallthru
      _
    %v59 = vld [vmem:[#allocation2] sm:$0xff]
    %v60 = vld [vmem:[#allocation2 + $0x8] sm:$0xff]
    %v61 = vxor.u32 %v59, 2147483648
    %v62 = vxor.u32 %v60, 2147483648
    %v63 = vmul.f32 %v61, 1.442695
    %v64 = vpow.pop %v63
    %v65 = vmul.f32 %v62, 1.442695
    %v66 = vpow.pop %v65
    %v67 = vadd.f32 %v64, 1.0
    %v68 = vadd.f32 %v66, 1.0
    %v69 = vrcp.pop %v67
    %v70 = vmul.f32 1.0, %v69
    %v71 = vrcp.pop %v68
    %v72 = vmul.f32 1.0, %v71
    %v73 = vld [vmem:[#allocation5] sm:$0xff]
    %v74 = vld [vmem:[#allocation5 + $0x8] sm:$0xff]
    %v75 = vmul.f32 %v70, %v73
    %v76 = vmul.f32 %v72, %v74
    %v77 = vld [vmem:[#allocation7] sm:$0xff]
    %v78 = vadd.f32 %v75, %v76
    %v79 = vadd.f32 %v77, %v78
    %80 = vst [vmem:[#allocation7] sm:$0xff] %v79
    %v81 = vld [vmem:[#allocation7 + $0x8] sm:$0xff]
    %v82 = vadd.f32 %v70, %v72
    %v83 = vadd.f32 %v81, %v82
    %84 = vst [vmem:[#allocation7 + $0x8] sm:$0xff] %v83
    %v85 = vld [vmem:[#allocation7 + $0x10] sm:$0xff]
    %v86 = vadd.f32 %v73, %v74
    %v87 = vadd.f32 %v85, %v86
    %88 = vst [vmem:[#allocation7 + $0x10] sm:$0xff] %v87
    // Predicated region
    $region22: #{tpu_custom_call.1} parent=1 // pred_check
      _
    $region23: #{tpu_custom_call.1} parent=1 // pred_check_branch
      %90 = sbr.rel (0) target = $region25
    $region24: #{tpu_custom_call.1} parent=1 // pred_region
      %s92 = ssub.s32 384, 384
      %93 = vsyncadd [#allocation4], %s92
      %s94 = sshll.u32 [#allocation7], 4
      %s95 = int_to_ptr.vmem [resolvable:$true] %s94
      %100 = dma.vmem_to_hbm [thread:$0]  %s95, 384, %s2, [#allocation4], 128, 128, 8
    $region25: #{tpu_custom_call.1} parent=1 // pred_fallthru
      _
    // Predicated region
    $region26: #{tpu_custom_call.1} parent=1 // pred_check
      _
    $region27: #{tpu_custom_call.1} parent=1 // pred_check_branch
      %102 = sbr.rel (0) target = $region29
    $region28: #{tpu_custom_call.1} parent=1 // pred_region
      %103 = dma.done [#allocation4], 384
    $region29: #{tpu_custom_call.1} parent=1 // pred_fallthru
      _
    %104 = vsyncpa [#allocation3], 1
    %105 = vsyncpa [#allocation6], 1
    %106 = vsyncpa [#allocation4], 1

</llo_original>
